<compile_context>
chip_gen: v5e
topology: v5e:2x2
jax: 0.10.0
libtpu: 0.0.40
codegen_flags: <defaults>
</compile_context>

<pallas_src>
import functools

import jax
import jax.numpy as jnp
from jax.experimental import pallas as pl
from jax.experimental.pallas import tpu as pltpu


# ---------------------------------------------------------------------------
# Kernel helpers
# ---------------------------------------------------------------------------

def _store_packed(ref, x):
    """Store x:(bh_t, lq_t, X) into the lane-dense ref:(lq_t, bh_t*X).

    Masked writes happen VMEM-side only; the HBM writeback of the block is a
    dense, unmasked store.
    """
    bh_t, _, x_w = x.shape
    for b in range(bh_t):                       # static unroll, VMEM stores
        ref[:, b * x_w:(b + 1) * x_w] = x[b].astype(ref.dtype)


def _store_out(ref, x, packed):
    if packed:
        _store_packed(ref, x)
    else:
        ref[...] = x.astype(ref.dtype)


def _scores_f32(q, k, scale, fold_scale, use_vpu):
    """(bh_t, lq_t, dk) x (bh_t, dk, lk_t) -> f32 scores (bh_t, lq_t, lk_t)."""
    if fold_scale:
        # f32 compute: fold the frozen scale into q (O(Lq*Dk) multiplies).
        q = q * jnp.asarray(scale, q.dtype)
    if use_vpu:
        # d_k is tiny: an MXU contraction would be <4% utilized and latency
        # bound on push/pop cadence; do it on otherwise-idle VPU slots with
        # f32 accumulation (static unroll over d_k).
        q32 = q.astype(jnp.float32)
        k32 = k.astype(jnp.float32)
        dk = q.shape[-1]
        scores = q32[:, :, 0:1] * k32[:, 0:1, :]
        for d in range(1, dk):
            scores = scores + q32[:, :, d:d + 1] * k32[:, d:d + 1, :]
    else:
        scores = jnp.einsum("bqd,bdk->bqk", q, k,
                            preferred_element_type=jnp.float32)
    if not fold_scale:
        # Low-precision compute: scale the f32 scores (matches the reference
        # `matmul(q, k) * scale` rounding order).
        scores = scores * jnp.float32(scale)
    return scores


# ---------------------------------------------------------------------------
# Kernel
# ---------------------------------------------------------------------------

def _sdpa_kernel(*refs, scale, fold_scale, approx_recip, with_attn,
                 use_vpu_scores, pack_out, pack_attn, multi_kv):
    q_ref, k_ref, v_ref, out_ref = refs[:4]
    pos = 4
    attn_ref = None
    if with_attn:
        attn_ref = refs[pos]
        pos += 1
    if multi_kv:
        m_ref, l_ref, acc_ref = refs[pos:pos + 3]

    q = q_ref[...]
    k = k_ref[...]
    v = v_ref[...]

    scores = _scores_f32(q, k, scale, fold_scale, use_vpu_scores)

    # TODO(synk): `prev`, `attn_mask`, `key_padding_mask` branches omitted
    # (all None in the default forward path).

    if not multi_kv:
        # Single pass over keys: numerically stable softmax, all math in f32.
        m = jnp.max(scores, axis=-1, keepdims=True)
        e = jnp.exp(scores - m)
        denom = jnp.sum(e, axis=-1, keepdims=True)
        w = e * pl.reciprocal(denom, approx=approx_recip)
        # attn_dropout = 0.0 -> identity.
        out = jnp.einsum("bqk,bkd->bqd", w.astype(v.dtype), v,
                         preferred_element_type=jnp.float32)
        _store_out(out_ref, out, pack_out)
        if with_attn:
            _store_out(attn_ref, w, pack_attn)
    else:
        # Online (flash-style) softmax across the keys grid axis.
        kv_step = pl.program_id(2)

        @pl.when(kv_step == 0)
        def _():
            m_ref[...] = jnp.full_like(m_ref, -jnp.inf)
            l_ref[...] = jnp.zeros_like(l_ref)
            acc_ref[...] = jnp.zeros_like(acc_ref)

        m_prev = m_ref[...]
        m_new = jnp.maximum(m_prev, jnp.max(scores, axis=-1, keepdims=True))
        alpha = jnp.exp(m_prev - m_new)
        p = jnp.exp(scores - m_new)
        l_ref[...] = alpha * l_ref[...] + jnp.sum(p, axis=-1, keepdims=True)
        acc_ref[...] = alpha * acc_ref[...] + jnp.einsum(
            "bqk,bkd->bqd", p.astype(v.dtype), v,
            preferred_element_type=jnp.float32)
        m_ref[...] = m_new

        @pl.when(kv_step == pl.num_programs(2) - 1)
        def _():
            out = acc_ref[...] * pl.reciprocal(l_ref[...], approx=approx_recip)
            _store_out(out_ref, out, pack_out)


# ---------------------------------------------------------------------------
# Tiling / VMEM policy
# ---------------------------------------------------------------------------

_DEFAULT_VMEM_CAPACITY = 64 * 1024 * 1024      # conservative: v7x per-TC VMEM


def _vmem_capacity_bytes():
    try:
        info = pltpu.get_tpu_info()
        cap = getattr(info, "vmem_capacity_bytes", None)
        if cap:
            return int(cap)
    except Exception:                           # off-TPU / old runtime
        pass
    return _DEFAULT_VMEM_CAPACITY


def _pick_kv_tile(lk, with_attn):
    """Keys-axis tile (online softmax) for the output-only path.

    Tiles must be multiples of 128 (lane constraint on the k block) and are
    only used when the attention weights are not materialized.
    """
    if with_attn or lk <= 1024:
        return lk
    for t in (1024, 896, 768, 640, 512, 384, 256, 128):
        if lk % t == 0:
            return t
    return lk


def _choose_tiles(*, bh, lq, dk, lk_t, lk_full, dv, compute_bytes, out_bytes,
                  attn_bytes, with_attn, pack_out, pack_attn, row_gran,
                  budget):
    """Pick (bh_t, lq_t) so one double-buffered pipeline step fits `budget`."""

    def fits(bh_t, lq_t):
        io = compute_bytes * bh_t * (lq_t * dk + dk * lk_t + lk_t * dv)
        io += out_bytes * bh_t * lq_t * dv
        if with_attn:
            io += attn_bytes * bh_t * lq_t * lk_full
        # ~5 live f32 score-sized intermediates (scores, exp, weights, dtype
        # cast copy, slack) + f32 output/acc + running softmax stats.
        scratch = 4 * bh_t * lq_t * (5 * lk_t + dv + 2)
        return 2 * io + scratch <= budget

    def bh_ok(bh_t):
        if bh % bh_t:
            return False
        # Lane-dense packed outputs: block last dim must be 128-aligned or
        # cover the full packed dim.
        if pack_out and bh_t != bh and (bh_t * dv) % 128:
            return False
        if with_attn and pack_attn and bh_t != bh and (bh_t * lk_full) % 128:
            return False
        return True

    def lq_ok(lq_t):
        return lq % lq_t == 0 and (lq_t == lq or lq_t % row_gran == 0)

    bh_cands = [t for t in range(bh, 0, -1) if bh_ok(t)]   # bh_t == bh always valid
    lq_cands = [t for t in range(lq, 0, -1) if lq_ok(t)]   # lq_t == lq always valid
    for bh_t in bh_cands:            # fuse as many heads per step as possible
        for lq_t in lq_cands:        # then the largest query tile that fits
            if fits(bh_t, lq_t):
                return bh_t, lq_t
    # Nothing fits the soft budget: take the smallest legal tiles and rely on
    # the generation-aware vmem_limit headroom (the no-attn path already
    # bounds lk_t via keys tiling, so this is a corner case).
    return bh_cands[-1], lq_cands[-1]


# ---------------------------------------------------------------------------
# Wrapper
# ---------------------------------------------------------------------------

def scaled_dot_product_attention(q, k, v, scale, *, return_attn=True,
                                 approx_recip=True, attn_dtype=None,
                                 compute_dtype=None, kv_tile=None):
    """q: (bs, H, Lq, Dk), k: (bs, H, Dk, Lk), v: (bs, H, Lk, Dv).

    Matches `_ScaledDotProductAttention.forward` with res_attention=False,
    attn_dropout=0.0, prev/masks=None.  Returns (output, attn_weights) or
    just output when return_attn=False (hot-path option: drops the O(L^2)
    HBM writeback and enables keys-axis tiling).

    Note: approx_recip=True uses the EUP approximate reciprocal, so returned
    attention rows do not sum to exactly 1.
    """
    bs, nh, lq, dk = q.shape
    lk = k.shape[-1]
    dv = v.shape[-1]
    bh = bs * nh

    out_dtype = q.dtype
    attn_dtype = out_dtype if attn_dtype is None else jnp.dtype(attn_dtype)
    compute_dtype = q.dtype if compute_dtype is None else jnp.dtype(compute_dtype)

    qf = q.reshape(bh, lq, dk).astype(compute_dtype)
    kf = k.reshape(bh, dk, lk).astype(compute_dtype)
    vf = v.reshape(bh, lk, dv).astype(compute_dtype)

    with_attn = bool(return_attn)

    # Keys-axis tiling (online softmax) only for the output-only path.
    if (kv_tile is not None and not with_attn and lk % kv_tile == 0
            and (kv_tile == lk or kv_tile % 128 == 0)):
        lk_t = int(kv_tile)
    else:
        lk_t = _pick_kv_tile(lk, with_attn)
    multi_kv = lk_t != lk

    # Lane-dense repacking whenever the native last dim would force masked
    # (sub-128-lane) HBM stores.
    pack_out = dv < 128
    pack_attn = lk < 128

    # Generation-aware VMEM numbers (64 MiB/TC on v7x, 128 MiB on v5e/v6e).
    cap = _vmem_capacity_bytes()
    budget = int(0.38 * cap)
    vmem_limit = int(0.70 * cap)

    itemsizes = [jnp.dtype(compute_dtype).itemsize,
                 jnp.dtype(out_dtype).itemsize]
    if with_attn:
        itemsizes.append(jnp.dtype(attn_dtype).itemsize)
    row_gran = 32 // min(itemsizes)            # 8 rows f32 / 16 bf16 / 32 8-bit

    bh_t, lq_t = _choose_tiles(
        bh=bh, lq=lq, dk=dk, lk_t=lk_t, lk_full=lk, dv=dv,
        compute_bytes=jnp.dtype(compute_dtype).itemsize,
        out_bytes=jnp.dtype(out_dtype).itemsize,
        attn_bytes=jnp.dtype(attn_dtype).itemsize if with_attn else 0,
        with_attn=with_attn, pack_out=pack_out, pack_attn=pack_attn,
        row_gran=row_gran, budget=budget)

    # VPU score contraction only for tiny heads AND small score tiles - the
    # MXU wins on large tiles even at dk=8.
    use_vpu_scores = dk <= 8 and (lq_t * lk_t) <= 128 * 128
    fold_scale = jnp.dtype(compute_dtype).itemsize >= 4

    if multi_kv:
        grid = (bh // bh_t, lq // lq_t, lk // lk_t)
        dims = ("parallel", "arbitrary", "arbitrary")
        q_spec = pl.BlockSpec((bh_t, lq_t, dk), lambda b, i, j: (b, i, 0))
        k_spec = pl.BlockSpec((bh_t, dk, lk_t), lambda b, i, j: (b, 0, j))
        v_spec = pl.BlockSpec((bh_t, lk_t, dv), lambda b, i, j: (b, j, 0))
        if pack_out:
            o_spec = pl.BlockSpec((lq_t, bh_t * dv), lambda b, i, j: (i, b))
            o_shape = jax.ShapeDtypeStruct((lq, bh * dv), out_dtype)
        else:
            o_spec = pl.BlockSpec((bh_t, lq_t, dv), lambda b, i, j: (b, i, 0))
            o_shape = jax.ShapeDtypeStruct((bh, lq, dv), out_dtype)
        out_specs, out_shape = o_spec, o_shape
        scratch_shapes = (pltpu.VMEM((bh_t, lq_t, 1), jnp.float32),
                          pltpu.VMEM((bh_t, lq_t, 1), jnp.float32),
                          pltpu.VMEM((bh_t, lq_t, dv), jnp.float32))
    else:
        grid = (bh // bh_t, lq // lq_t)
        # bh axis first + "parallel" so a v7x 2-TC split lands on heads and
        # each core keeps its own k/v block resident across lq steps.
        dims = ("parallel", "arbitrary")
        q_spec = pl.BlockSpec((bh_t, lq_t, dk), lambda b, i: (b, i, 0))
        k_spec = pl.BlockSpec((bh_t, dk, lk), lambda b, i: (b, 0, 0))
        v_spec = pl.BlockSpec((bh_t, lk, dv), lambda b, i: (b, 0, 0))
        if pack_out:
            o_spec = pl.BlockSpec((lq_t, bh_t * dv), lambda b, i: (i, b))
            o_shape = jax.ShapeDtypeStruct((lq, bh * dv), out_dtype)
        else:
            o_spec = pl.BlockSpec((bh_t, lq_t, dv), lambda b, i: (b, i, 0))
            o_shape = jax.ShapeDtypeStruct((bh, lq, dv), out_dtype)
        scratch_shapes = ()
        if with_attn:
            if pack_attn:
                a_spec = pl.BlockSpec((lq_t, bh_t * lk), lambda b, i: (i, b))
                a_shape = jax.ShapeDtypeStruct((lq, bh * lk), attn_dtype)
            else:
                a_spec = pl.BlockSpec((bh_t, lq_t, lk), lambda b, i: (b, i, 0))
                a_shape = jax.ShapeDtypeStruct((bh, lq, lk), attn_dtype)
            out_specs = (o_spec, a_spec)
            out_shape = (o_shape, a_shape)
        else:
            out_specs, out_shape = o_spec, o_shape

    kernel = functools.partial(
        _sdpa_kernel, scale=float(scale), fold_scale=fold_scale,
        approx_recip=approx_recip, with_attn=with_attn,
        use_vpu_scores=use_vpu_scores, pack_out=pack_out,
        pack_attn=pack_attn, multi_kv=multi_kv)

    result = pl.pallas_call(
        kernel,
        grid=grid,
        in_specs=[q_spec, k_spec, v_spec],
        out_specs=out_specs,
        out_shape=out_shape,
        scratch_shapes=scratch_shapes,
        compiler_params=pltpu.CompilerParams(
            dimension_semantics=dims,
            vmem_limit_bytes=vmem_limit),
    )(qf, kf, vf)

    if with_attn:
        out_p, attn_p = result
    else:
        out_p = result

    # Layout plumbing back to the caller's (bs, n_heads, L, d) convention.
    if pack_out:
        out = jnp.transpose(out_p.reshape(lq, bh, dv), (1, 0, 2))
    else:
        out = out_p
    out = out.reshape(bs, nh, lq, dv)

    if with_attn:
        if pack_attn:
            attn = jnp.transpose(attn_p.reshape(lq, bh, lk), (1, 0, 2))
        else:
            attn = attn_p
        attn = attn.reshape(bs, nh, lq, lk)
        return out, attn
    return out


# ---------------------------------------------------------------------------
# Reference + self-test
# ---------------------------------------------------------------------------

def _reference(q, k, v, scale):
    scores = jnp.einsum("bhqd,bhdk->bhqk", q.astype(jnp.float32),
                        k.astype(jnp.float32)) * scale
    w = jax.nn.softmax(scores, axis=-1)
    out = jnp.einsum("bhqk,bhkd->bhqd", w, v.astype(jnp.float32))
    return out, w


if __name__ == "__main__":
    # Module config: d_model=32, n_heads=4 -> head_dim=8, scale=8**-0.5
    bs, n_heads, d_model = 2, 4, 32
    head_dim = d_model // n_heads
    q_len = seq_len = 8
    scale = head_dim ** (-0.5)     # nn.Parameter init (lsa=False -> frozen)

    key = jax.random.PRNGKey(0)
    kq, kk, kv, kq2, kk2, kv2, kk3, kv3 = jax.random.split(key, 8)
    q = jax.random.normal(kq, (bs, n_heads, q_len, head_dim), jnp.float32)
    k = jax.random.normal(kk, (bs, n_heads, head_dim, seq_len), jnp.float32)
    v = jax.random.normal(kv, (bs, n_heads, seq_len, head_dim), jnp.float32)

    ref_out, ref_attn = _reference(q, k, v, scale)

    # 1) Exact-reciprocal f32 path: tight check against the f32 reference.
    out, attn = scaled_dot_product_attention(q, k, v, scale, approx_recip=False)
    out, attn = jax.block_until_ready((out, attn))
    assert jnp.allclose(out, ref_out, atol=1e-5, rtol=1e-5)
    assert jnp.allclose(attn, ref_attn, atol=1e-5, rtol=1e-5)

    # 2) Default fast path (EUP approximate reciprocal): loose sanity check.
    out_f, attn_f = scaled_dot_product_attention(q, k, v, scale)
    out_f, attn_f = jax.block_until_ready((out_f, attn_f))
    assert jnp.allclose(out_f, ref_out, atol=1e-2, rtol=1e-2)
    assert jnp.allclose(attn_f, ref_attn, atol=1e-2, rtol=1e-2)

    # 3) Output-only path (drops the O(L^2) attention-weights HBM writeback).
    out_only = scaled_dot_product_attention(q, k, v, scale, return_attn=False,
                                            approx_recip=False)
    out_only = jax.block_until_ready(out_only)
    assert jnp.allclose(out_only, ref_out, atol=1e-5, rtol=1e-5)

    # 4) bf16 compute dtype (halved HBM traffic; softmax math stays f32).
    out_bf, attn_bf = scaled_dot_product_attention(
        q, k, v, scale, approx_recip=False, compute_dtype=jnp.bfloat16)
    out_bf, attn_bf = jax.block_until_ready((out_bf, attn_bf))
    assert jnp.allclose(out_bf, ref_out, atol=3e-2, rtol=3e-2)
    assert jnp.allclose(attn_bf, ref_attn, atol=3e-2, rtol=3e-2)

    # 5) Larger head_dim exercises the MXU score path (d_k=16 > VPU cutoff).
    hd2 = 16
    scale2 = hd2 ** (-0.5)
    q2 = jax.random.normal(kq2, (bs, n_heads, q_len, hd2), jnp.float32)
    k2 = jax.random.normal(kk2, (bs, n_heads, hd2, seq_len), jnp.float32)
    v2 = jax.random.normal(kv2, (bs, n_heads, seq_len, hd2), jnp.float32)
    ref2_out, ref2_attn = _reference(q2, k2, v2, scale2)
    out2, attn2 = scaled_dot_product_attention(q2, k2, v2, scale2,
                                               approx_recip=False)
    out2, attn2 = jax.block_until_ready((out2, attn2))
    assert jnp.allclose(out2, ref2_out, atol=1e-5, rtol=1e-5)
    assert jnp.allclose(attn2, ref2_attn, atol=1e-5, rtol=1e-5)

    # 6) Longer key sequence exercises the online-softmax (keys-tiled) path.
    lk3 = 256
    k3 = jax.random.normal(kk3, (bs, n_heads, head_dim, lk3), jnp.float32)
    v3 = jax.random.normal(kv3, (bs, n_heads, lk3, head_dim), jnp.float32)
    ref3_out, _ = _reference(q, k3, v3, scale)
    out3 = scaled_dot_product_attention(q, k3, v3, scale, return_attn=False,
                                        approx_recip=False, kv_tile=128)
    out3 = jax.block_until_ready(out3)
    assert jnp.allclose(out3, ref3_out, atol=1e-4, rtol=1e-4)

    print("KERNEL_OK")
</pallas_src>

<mosaic_0001>
module attributes {stable_mosaic.version = 11 : i64} {
  func.func @_sdpa_kernel(%arg0: i32, %arg1: i32, %arg2: memref<8x8x8xf32, #tpu.memory_space<vmem>>, %arg3: memref<8x8x8xf32, #tpu.memory_space<vmem>>, %arg4: memref<8x8x8xf32, #tpu.memory_space<vmem>>, %arg5: memref<8x64xf32, #tpu.memory_space<vmem>>, %arg6: memref<8x64xf32, #tpu.memory_space<vmem>>) attributes {dimension_semantics = [#tpu.dimension_semantics<parallel>, #tpu.dimension_semantics<arbitrary>], iteration_bounds = array<i64: 1, 1>, scalar_prefetch = 0 : i64, scratch_operands = 0 : i64, tpu.core_type = #tpu.core_type<tc>, window_params = [{transform_indices = @transform_0, window_bounds = array<i64: 8, 8, 8>}, {transform_indices = @transform_1, window_bounds = array<i64: 8, 8, 8>}, {transform_indices = @transform_2, window_bounds = array<i64: 8, 8, 8>}, {transform_indices = @transform_3, window_bounds = array<i64: 8, 64>}, {transform_indices = @transform_4, window_bounds = array<i64: 8, 64>}]} {
    %c0 = arith.constant 0 : index
    %c0_0 = arith.constant 0 : index
    %c0_1 = arith.constant 0 : index
    %0 = vector.load %arg2[%c0, %c0_0, %c0_1] : memref<8x8x8xf32, #tpu.memory_space<vmem>>, vector<8x8x8xf32>
    %c0_2 = arith.constant 0 : index
    %c0_3 = arith.constant 0 : index
    %c0_4 = arith.constant 0 : index
    %1 = vector.load %arg3[%c0_2, %c0_3, %c0_4] : memref<8x8x8xf32, #tpu.memory_space<vmem>>, vector<8x8x8xf32>
    %c0_5 = arith.constant 0 : index
    %c0_6 = arith.constant 0 : index
    %c0_7 = arith.constant 0 : index
    %2 = vector.load %arg4[%c0_5, %c0_6, %c0_7] : memref<8x8x8xf32, #tpu.memory_space<vmem>>, vector<8x8x8xf32>
    %cst = arith.constant 0.353553385 : f32
    %3 = vector.broadcast %cst : f32 to vector<8x8x8xf32>
    %4 = arith.mulf %0, %3 : vector<8x8x8xf32>
    %5 = vector.extract_strided_slice %4 {offsets = [0, 0, 0], sizes = [8, 8, 1], strides = [1, 1, 1]} : vector<8x8x8xf32> to vector<8x8x1xf32>
    %6 = vector.extract_strided_slice %1 {offsets = [0, 0, 0], sizes = [8, 1, 8], strides = [1, 1, 1]} : vector<8x8x8xf32> to vector<8x1x8xf32>
    %7 = vector.broadcast %5 : vector<8x8x1xf32> to vector<8x8x8xf32>
    %8 = vector.broadcast %6 : vector<8x1x8xf32> to vector<8x8x8xf32>
    %9 = arith.mulf %7, %8 : vector<8x8x8xf32>
    %10 = vector.extract_strided_slice %4 {offsets = [0, 0, 1], sizes = [8, 8, 1], strides = [1, 1, 1]} : vector<8x8x8xf32> to vector<8x8x1xf32>
    %11 = vector.extract_strided_slice %1 {offsets = [0, 1, 0], sizes = [8, 1, 8], strides = [1, 1, 1]} : vector<8x8x8xf32> to vector<8x1x8xf32>
    %12 = vector.broadcast %10 : vector<8x8x1xf32> to vector<8x8x8xf32>
    %13 = vector.broadcast %11 : vector<8x1x8xf32> to vector<8x8x8xf32>
    %14 = arith.mulf %12, %13 : vector<8x8x8xf32>
    %15 = arith.addf %9, %14 : vector<8x8x8xf32>
    %16 = vector.extract_strided_slice %4 {offsets = [0, 0, 2], sizes = [8, 8, 1], strides = [1, 1, 1]} : vector<8x8x8xf32> to vector<8x8x1xf32>
    %17 = vector.extract_strided_slice %1 {offsets = [0, 2, 0], sizes = [8, 1, 8], strides = [1, 1, 1]} : vector<8x8x8xf32> to vector<8x1x8xf32>
    %18 = vector.broadcast %16 : vector<8x8x1xf32> to vector<8x8x8xf32>
    %19 = vector.broadcast %17 : vector<8x1x8xf32> to vector<8x8x8xf32>
    %20 = arith.mulf %18, %19 : vector<8x8x8xf32>
    %21 = arith.addf %15, %20 : vector<8x8x8xf32>
    %22 = vector.extract_strided_slice %4 {offsets = [0, 0, 3], sizes = [8, 8, 1], strides = [1, 1, 1]} : vector<8x8x8xf32> to vector<8x8x1xf32>
    %23 = vector.extract_strided_slice %1 {offsets = [0, 3, 0], sizes = [8, 1, 8], strides = [1, 1, 1]} : vector<8x8x8xf32> to vector<8x1x8xf32>
    %24 = vector.broadcast %22 : vector<8x8x1xf32> to vector<8x8x8xf32>
    %25 = vector.broadcast %23 : vector<8x1x8xf32> to vector<8x8x8xf32>
    %26 = arith.mulf %24, %25 : vector<8x8x8xf32>
    %27 = arith.addf %21, %26 : vector<8x8x8xf32>
    %28 = vector.extract_strided_slice %4 {offsets = [0, 0, 4], sizes = [8, 8, 1], strides = [1, 1, 1]} : vector<8x8x8xf32> to vector<8x8x1xf32>
    %29 = vector.extract_strided_slice %1 {offsets = [0, 4, 0], sizes = [8, 1, 8], strides = [1, 1, 1]} : vector<8x8x8xf32> to vector<8x1x8xf32>
    %30 = vector.broadcast %28 : vector<8x8x1xf32> to vector<8x8x8xf32>
    %31 = vector.broadcast %29 : vector<8x1x8xf32> to vector<8x8x8xf32>
    %32 = arith.mulf %30, %31 : vector<8x8x8xf32>
    %33 = arith.addf %27, %32 : vector<8x8x8xf32>
    %34 = vector.extract_strided_slice %4 {offsets = [0, 0, 5], sizes = [8, 8, 1], strides = [1, 1, 1]} : vector<8x8x8xf32> to vector<8x8x1xf32>
    %35 = vector.extract_strided_slice %1 {offsets = [0, 5, 0], sizes = [8, 1, 8], strides = [1, 1, 1]} : vector<8x8x8xf32> to vector<8x1x8xf32>
    %36 = vector.broadcast %34 : vector<8x8x1xf32> to vector<8x8x8xf32>
    %37 = vector.broadcast %35 : vector<8x1x8xf32> to vector<8x8x8xf32>
    %38 = arith.mulf %36, %37 : vector<8x8x8xf32>
    %39 = arith.addf %33, %38 : vector<8x8x8xf32>
    %40 = vector.extract_strided_slice %4 {offsets = [0, 0, 6], sizes = [8, 8, 1], strides = [1, 1, 1]} : vector<8x8x8xf32> to vector<8x8x1xf32>
    %41 = vector.extract_strided_slice %1 {offsets = [0, 6, 0], sizes = [8, 1, 8], strides = [1, 1, 1]} : vector<8x8x8xf32> to vector<8x1x8xf32>
    %42 = vector.broadcast %40 : vector<8x8x1xf32> to vector<8x8x8xf32>
    %43 = vector.broadcast %41 : vector<8x1x8xf32> to vector<8x8x8xf32>
    %44 = arith.mulf %42, %43 : vector<8x8x8xf32>
    %45 = arith.addf %39, %44 : vector<8x8x8xf32>
    %46 = vector.extract_strided_slice %4 {offsets = [0, 0, 7], sizes = [8, 8, 1], strides = [1, 1, 1]} : vector<8x8x8xf32> to vector<8x8x1xf32>
    %47 = vector.extract_strided_slice %1 {offsets = [0, 7, 0], sizes = [8, 1, 8], strides = [1, 1, 1]} : vector<8x8x8xf32> to vector<8x1x8xf32>
    %48 = vector.broadcast %46 : vector<8x8x1xf32> to vector<8x8x8xf32>
    %49 = vector.broadcast %47 : vector<8x1x8xf32> to vector<8x8x8xf32>
    %50 = arith.mulf %48, %49 : vector<8x8x8xf32>
    %51 = arith.addf %45, %50 : vector<8x8x8xf32>
    %cst_8 = arith.constant dense<0xFF800000> : vector<8x8xf32>
    %52 = vector.multi_reduction <maximumf>, %51, %cst_8 [2] : vector<8x8x8xf32> to vector<8x8xf32>
    %53 = vector.shape_cast %52 : vector<8x8xf32> to vector<8x8x1xf32>
    %54 = vector.broadcast %53 : vector<8x8x1xf32> to vector<8x8x8xf32>
    %55 = arith.subf %51, %54 : vector<8x8x8xf32>
    %56 = math.exp %55 : vector<8x8x8xf32>
    %cst_9 = arith.constant dense<0.000000e+00> : vector<8x8xf32>
    %57 = vector.multi_reduction <add>, %56, %cst_9 [2] : vector<8x8x8xf32> to vector<8x8xf32>
    %58 = vector.shape_cast %57 : vector<8x8xf32> to vector<8x8x1xf32>
    %59 = tpu.reciprocal %58 : vector<8x8x1xf32> -> vector<8x8x1xf32>
    %60 = vector.broadcast %59 : vector<8x8x1xf32> to vector<8x8x8xf32>
    %61 = arith.mulf %56, %60 : vector<8x8x8xf32>
    "tpu.trace_start"() <{level = 10 : i32, message = "bqk,bkd->bqd"}> : () -> ()
    %cst_10 = arith.constant dense<0.000000e+00> : vector<8x8x8xf32>
    %62 = tpu.matmul %61, %2, %cst_10 {dimension_numbers = #tpu.dot_dimension_numbers<[2], [1], [1], [2], [0, 0, 0, 1, 1, 2], [0], [0]>} : vector<8x8x8xf32>, vector<8x8x8xf32>, vector<8x8x8xf32> -> vector<8x8x8xf32>
    "tpu.trace_stop"() : () -> ()
    %63 = vector.extract_strided_slice %62 {offsets = [0, 0, 0], sizes = [1, 8, 8], strides = [1, 1, 1]} : vector<8x8x8xf32> to vector<1x8x8xf32>
    %64 = vector.shape_cast %63 : vector<1x8x8xf32> to vector<8x8xf32>
    %c0_11 = arith.constant 0 : index
    %c0_12 = arith.constant 0 : index
    %65 = vector.load %arg5[%c0_11, %c0_12] : memref<8x64xf32, #tpu.memory_space<vmem>>, vector<8x8xf32>
    tpu.vector_store %arg5[%c0_11, %c0_12], %64 {strides = array<i32>} : memref<8x64xf32, #tpu.memory_space<vmem>>, vector<8x8xf32>,
    %66 = vector.extract_strided_slice %62 {offsets = [1, 0, 0], sizes = [1, 8, 8], strides = [1, 1, 1]} : vector<8x8x8xf32> to vector<1x8x8xf32>
    %67 = vector.shape_cast %66 : vector<1x8x8xf32> to vector<8x8xf32>
    %c0_13 = arith.constant 0 : index
    %c8 = arith.constant 8 : index
    %68 = vector.load %arg5[%c0_13, %c8] : memref<8x64xf32, #tpu.memory_space<vmem>>, vector<8x8xf32>
    tpu.vector_store %arg5[%c0_13, %c8], %67 {strides = array<i32>} : memref<8x64xf32, #tpu.memory_space<vmem>>, vector<8x8xf32>,
    %69 = vector.extract_strided_slice %62 {offsets = [2, 0, 0], sizes = [1, 8, 8], strides = [1, 1, 1]} : vector<8x8x8xf32> to vector<1x8x8xf32>
    %70 = vector.shape_cast %69 : vector<1x8x8xf32> to vector<8x8xf32>
    %c0_14 = arith.constant 0 : index
    %c16 = arith.constant 16 : index
    %71 = vector.load %arg5[%c0_14, %c16] : memref<8x64xf32, #tpu.memory_space<vmem>>, vector<8x8xf32>
    tpu.vector_store %arg5[%c0_14, %c16], %70 {strides = array<i32>} : memref<8x64xf32, #tpu.memory_space<vmem>>, vector<8x8xf32>,
    %72 = vector.extract_strided_slice %62 {offsets = [3, 0, 0], sizes = [1, 8, 8], strides = [1, 1, 1]} : vector<8x8x8xf32> to vector<1x8x8xf32>
    %73 = vector.shape_cast %72 : vector<1x8x8xf32> to vector<8x8xf32>
    %c0_15 = arith.constant 0 : index
    %c24 = arith.constant 24 : index
    %74 = vector.load %arg5[%c0_15, %c24] : memref<8x64xf32, #tpu.memory_space<vmem>>, vector<8x8xf32>
    tpu.vector_store %arg5[%c0_15, %c24], %73 {strides = array<i32>} : memref<8x64xf32, #tpu.memory_space<vmem>>, vector<8x8xf32>,
    %75 = vector.extract_strided_slice %62 {offsets = [4, 0, 0], sizes = [1, 8, 8], strides = [1, 1, 1]} : vector<8x8x8xf32> to vector<1x8x8xf32>
    %76 = vector.shape_cast %75 : vector<1x8x8xf32> to vector<8x8xf32>
    %c0_16 = arith.constant 0 : index
    %c32 = arith.constant 32 : index
    %77 = vector.load %arg5[%c0_16, %c32] : memref<8x64xf32, #tpu.memory_space<vmem>>, vector<8x8xf32>
    tpu.vector_store %arg5[%c0_16, %c32], %76 {strides = array<i32>} : memref<8x64xf32, #tpu.memory_space<vmem>>, vector<8x8xf32>,
    %78 = vector.extract_strided_slice %62 {offsets = [5, 0, 0], sizes = [1, 8, 8], strides = [1, 1, 1]} : vector<8x8x8xf32> to vector<1x8x8xf32>
    %79 = vector.shape_cast %78 : vector<1x8x8xf32> to vector<8x8xf32>
    %c0_17 = arith.constant 0 : index
    %c40 = arith.constant 40 : index
    %80 = vector.load %arg5[%c0_17, %c40] : memref<8x64xf32, #tpu.memory_space<vmem>>, vector<8x8xf32>
    tpu.vector_store %arg5[%c0_17, %c40], %79 {strides = array<i32>} : memref<8x64xf32, #tpu.memory_space<vmem>>, vector<8x8xf32>,
    %81 = vector.extract_strided_slice %62 {offsets = [6, 0, 0], sizes = [1, 8, 8], strides = [1, 1, 1]} : vector<8x8x8xf32> to vector<1x8x8xf32>
    %82 = vector.shape_cast %81 : vector<1x8x8xf32> to vector<8x8xf32>
    %c0_18 = arith.constant 0 : index
    %c48 = arith.constant 48 : index
    %83 = vector.load %arg5[%c0_18, %c48] : memref<8x64xf32, #tpu.memory_space<vmem>>, vector<8x8xf32>
    tpu.vector_store %arg5[%c0_18, %c48], %82 {strides = array<i32>} : memref<8x64xf32, #tpu.memory_space<vmem>>, vector<8x8xf32>,
    %84 = vector.extract_strided_slice %62 {offsets = [7, 0, 0], sizes = [1, 8, 8], strides = [1, 1, 1]} : vector<8x8x8xf32> to vector<1x8x8xf32>
    %85 = vector.shape_cast %84 : vector<1x8x8xf32> to vector<8x8xf32>
    %c0_19 = arith.constant 0 : index
    %c56 = arith.constant 56 : index
    %86 = vector.load %arg5[%c0_19, %c56] : memref<8x64xf32, #tpu.memory_space<vmem>>, vector<8x8xf32>
    tpu.vector_store %arg5[%c0_19, %c56], %85 {strides = array<i32>} : memref<8x64xf32, #tpu.memory_space<vmem>>, vector<8x8xf32>,
    %87 = vector.extract_strided_slice %61 {offsets = [0, 0, 0], sizes = [1, 8, 8], strides = [1, 1, 1]} : vector<8x8x8xf32> to vector<1x8x8xf32>
    %88 = vector.shape_cast %87 : vector<1x8x8xf32> to vector<8x8xf32>
    %c0_20 = arith.constant 0 : index
    %c0_21 = arith.constant 0 : index
    %89 = vector.load %arg6[%c0_20, %c0_21] : memref<8x64xf32, #tpu.memory_space<vmem>>, vector<8x8xf32>
    tpu.vector_store %arg6[%c0_20, %c0_21], %88 {strides = array<i32>} : memref<8x64xf32, #tpu.memory_space<vmem>>, vector<8x8xf32>,
    %90 = vector.extract_strided_slice %61 {offsets = [1, 0, 0], sizes = [1, 8, 8], strides = [1, 1, 1]} : vector<8x8x8xf32> to vector<1x8x8xf32>
    %91 = vector.shape_cast %90 : vector<1x8x8xf32> to vector<8x8xf32>
    %c0_22 = arith.constant 0 : index
    %c8_23 = arith.constant 8 : index
    %92 = vector.load %arg6[%c0_22, %c8_23] : memref<8x64xf32, #tpu.memory_space<vmem>>, vector<8x8xf32>
    tpu.vector_store %arg6[%c0_22, %c8_23], %91 {strides = array<i32>} : memref<8x64xf32, #tpu.memory_space<vmem>>, vector<8x8xf32>,
    %93 = vector.extract_strided_slice %61 {offsets = [2, 0, 0], sizes = [1, 8, 8], strides = [1, 1, 1]} : vector<8x8x8xf32> to vector<1x8x8xf32>
    %94 = vector.shape_cast %93 : vector<1x8x8xf32> to vector<8x8xf32>
    %c0_24 = arith.constant 0 : index
    %c16_25 = arith.constant 16 : index
    %95 = vector.load %arg6[%c0_24, %c16_25] : memref<8x64xf32, #tpu.memory_space<vmem>>, vector<8x8xf32>
    tpu.vector_store %arg6[%c0_24, %c16_25], %94 {strides = array<i32>} : memref<8x64xf32, #tpu.memory_space<vmem>>, vector<8x8xf32>,
    %96 = vector.extract_strided_slice %61 {offsets = [3, 0, 0], sizes = [1, 8, 8], strides = [1, 1, 1]} : vector<8x8x8xf32> to vector<1x8x8xf32>
    %97 = vector.shape_cast %96 : vector<1x8x8xf32> to vector<8x8xf32>
    %c0_26 = arith.constant 0 : index
    %c24_27 = arith.constant 24 : index
    %98 = vector.load %arg6[%c0_26, %c24_27] : memref<8x64xf32, #tpu.memory_space<vmem>>, vector<8x8xf32>
    tpu.vector_store %arg6[%c0_26, %c24_27], %97 {strides = array<i32>} : memref<8x64xf32, #tpu.memory_space<vmem>>, vector<8x8xf32>,
    %99 = vector.extract_strided_slice %61 {offsets = [4, 0, 0], sizes = [1, 8, 8], strides = [1, 1, 1]} : vector<8x8x8xf32> to vector<1x8x8xf32>
    %100 = vector.shape_cast %99 : vector<1x8x8xf32> to vector<8x8xf32>
    %c0_28 = arith.constant 0 : index
    %c32_29 = arith.constant 32 : index
    %101 = vector.load %arg6[%c0_28, %c32_29] : memref<8x64xf32, #tpu.memory_space<vmem>>, vector<8x8xf32>
    tpu.vector_store %arg6[%c0_28, %c32_29], %100 {strides = array<i32>} : memref<8x64xf32, #tpu.memory_space<vmem>>, vector<8x8xf32>,
    %102 = vector.extract_strided_slice %61 {offsets = [5, 0, 0], sizes = [1, 8, 8], strides = [1, 1, 1]} : vector<8x8x8xf32> to vector<1x8x8xf32>
    %103 = vector.shape_cast %102 : vector<1x8x8xf32> to vector<8x8xf32>
    %c0_30 = arith.constant 0 : index
    %c40_31 = arith.constant 40 : index
    %104 = vector.load %arg6[%c0_30, %c40_31] : memref<8x64xf32, #tpu.memory_space<vmem>>, vector<8x8xf32>
    tpu.vector_store %arg6[%c0_30, %c40_31], %103 {strides = array<i32>} : memref<8x64xf32, #tpu.memory_space<vmem>>, vector<8x8xf32>,
    %105 = vector.extract_strided_slice %61 {offsets = [6, 0, 0], sizes = [1, 8, 8], strides = [1, 1, 1]} : vector<8x8x8xf32> to vector<1x8x8xf32>
    %106 = vector.shape_cast %105 : vector<1x8x8xf32> to vector<8x8xf32>
    %c0_32 = arith.constant 0 : index
    %c48_33 = arith.constant 48 : index
    %107 = vector.load %arg6[%c0_32, %c48_33] : memref<8x64xf32, #tpu.memory_space<vmem>>, vector<8x8xf32>
    tpu.vector_store %arg6[%c0_32, %c48_33], %106 {strides = array<i32>} : memref<8x64xf32, #tpu.memory_space<vmem>>, vector<8x8xf32>,
    %108 = vector.extract_strided_slice %61 {offsets = [7, 0, 0], sizes = [1, 8, 8], strides = [1, 1, 1]} : vector<8x8x8xf32> to vector<1x8x8xf32>
    %109 = vector.shape_cast %108 : vector<1x8x8xf32> to vector<8x8xf32>
    %c0_34 = arith.constant 0 : index
    %c56_35 = arith.constant 56 : index
    %110 = vector.load %arg6[%c0_34, %c56_35] : memref<8x64xf32, #tpu.memory_space<vmem>>, vector<8x8xf32>
    tpu.vector_store %arg6[%c0_34, %c56_35], %109 {strides = array<i32>} : memref<8x64xf32, #tpu.memory_space<vmem>>, vector<8x8xf32>,
    return
  }
  func.func @transform_0(%arg0: i32, %arg1: i32) -> (i32, i32, i32) {
    %c0_i32 = arith.constant 0 : i32
    %c0_i32_0 = arith.constant 0 : i32
    return %arg0, %arg1, %c0_i32 : i32, i32, i32
  }
  func.func @transform_1(%arg0: i32, %arg1: i32) -> (i32, i32, i32) {
    %c0_i32 = arith.constant 0 : i32
    %c0_i32_0 = arith.constant 0 : i32
    %c0_i32_1 = arith.constant 0 : i32
    return %arg0, %c0_i32, %c0_i32_0 : i32, i32, i32
  }
  func.func @transform_2(%arg0: i32, %arg1: i32) -> (i32, i32, i32) {
    %c0_i32 = arith.constant 0 : i32
    %c0_i32_0 = arith.constant 0 : i32
    %c0_i32_1 = arith.constant 0 : i32
    return %arg0, %c0_i32, %c0_i32_0 : i32, i32, i32
  }
  func.func @transform_3(%arg0: i32, %arg1: i32) -> (i32, i32) {
    %c0_i32 = arith.constant 0 : i32
    return %arg1, %arg0 : i32, i32
  }
  func.func @transform_4(%arg0: i32, %arg1: i32) -> (i32, i32) {
    %c0_i32 = arith.constant 0 : i32
    return %arg1, %arg0 : i32, i32
  }
}

</mosaic_0001>

<llo_original>
// kernel: tpu_custom_call.1
$region0: #{tpu_custom_call.1}
  #allocation0 [shape = 'u32[]', space=smem, size = 0x4, offset = 0x4, fixed_abs, tag = 'smem constant byte address 0x4 - core index']
  #allocation1 [shape = 'u32[72,128]{1,0:T(1,128)}', space=vmem, size = 0x9000, scoped, tag = 'internal scratch']
  %s0 = inlined_call_operand.hbm [shape: f32[8,8,8], index: 0, kind: input, shape index: {}]
  %s1 = inlined_call_operand.hbm [shape: f32[8,8,8], index: 1, kind: input, shape index: {}]
  %s2 = inlined_call_operand.hbm [shape: f32[8,8,8], index: 2, kind: input, shape index: {}]
  %s3 = inlined_call_operand.hbm [shape: f32[8,64], index: 3, kind: output, shape index: {0}]
  %s4 = inlined_call_operand.hbm [shape: f32[8,64], index: 4, kind: output, shape index: {1}]
  %5 = xla_tuple %s3, %s4
  %s6 = sld [smem:[#allocation0]]
  $region42: #{tpu_custom_call.1} parent=0
    _
  %s8 = ssub.s32 1, %s6
  %s9 = scalar_select 0, %s8, %s6
  $region1: #{tpu_custom_call.1} parent=0
    #allocation2 [shape = 'u8[32768]{0}', space=vmem, size = 0x8000, scoped, tag = 'input window, operand 0, single buffered']
    #allocation3 [shape = 's32[1]{0}', space=sflag, size = 0x4, scoped, tag = 'scoped memory for tpu_custom_call.1']
    #allocation4 [shape = 's32[1]{0}', space=sflag, size = 0x4, scoped, tag = 'scoped memory for tpu_custom_call.1']
    #allocation5 [shape = 'u8[32768]{0}', space=vmem, size = 0x8000, scoped, tag = 'input window, operand 1, single buffered']
    #allocation6 [shape = 's32[1]{0}', space=sflag, size = 0x4, scoped, tag = 'scoped memory for tpu_custom_call.1']
    #allocation7 [shape = 'u8[32768]{0}', space=vmem, size = 0x8000, scoped, tag = 'input window, operand 2, single buffered']
    #allocation8 [shape = 'u8[4096]{0}', space=vmem, size = 0x1000, scoped, tag = 'output window, operand 0, single buffered']
    #allocation9 [shape = 'u8[4096]{0}', space=vmem, size = 0x1000, scoped, tag = 'output window, operand 1, single buffered']
    #allocation10 [shape = 's32[1]{0}', space=sflag, size = 0x4, scoped, tag = 'scoped memory for tpu_custom_call.1']
    %10 = vsyncpa [#allocation3], 0
    %11 = vsyncpa [#allocation6], 0
    %12 = vsyncpa [#allocation4], 0
    %13 = vsyncpa [#allocation10], 0
    // Predicated region
    $region2: #{tpu_custom_call.1} parent=1 // pred_check
      _
    $region3: #{tpu_custom_call.1} parent=1 // pred_check_branch
      %15 = sbr.rel (0) target = $region5
    $region4: #{tpu_custom_call.1} parent=1 // pred_region
      %17 = vsyncadd [#allocation3], 0
      %s18 = sshll.u32 %s0, 4
      %s19 = int_to_ptr.hbm [resolvable:$true] %s18
      %s20 = sshll.u32 [#allocation2], 4
      %s21 = int_to_ptr.vmem [resolvable:$true] %s20
      %26 = dma.hbm_to_vmem [thread:$0]  %s19, 1024, %s21, [#allocation3], 128, 128, 8
    $region5: #{tpu_custom_call.1} parent=1 // pred_fallthru
      _
    // Predicated region
    $region6: #{tpu_custom_call.1} parent=1 // pred_check
      _
    $region7: #{tpu_custom_call.1} parent=1 // pred_check_branch
      %28 = sbr.rel (0) target = $region9
    $region8: #{tpu_custom_call.1} parent=1 // pred_region
      %30 = vsyncadd [#allocation6], 0
      %s31 = sshll.u32 %s1, 4
      %s32 = int_to_ptr.hbm [resolvable:$true] %s31
      %s33 = sshll.u32 [#allocation5], 4
      %s34 = int_to_ptr.vmem [resolvable:$true] %s33
      %39 = dma.hbm_to_vmem [thread:$0]  %s32, 1024, %s34, [#allocation6], 128, 128, 8
    $region9: #{tpu_custom_call.1} parent=1 // pred_fallthru
      _
    // Predicated region
    $region10: #{tpu_custom_call.1} parent=1 // pred_check
      _
    $region11: #{tpu_custom_call.1} parent=1 // pred_check_branch
      %41 = sbr.rel (0) target = $region13
    $region12: #{tpu_custom_call.1} parent=1 // pred_region
      %43 = vsyncadd [#allocation6], 0
      %s44 = sshll.u32 %s2, 4
      %s45 = int_to_ptr.hbm [resolvable:$true] %s44
      %s46 = sshll.u32 [#allocation7], 4
      %s47 = int_to_ptr.vmem [resolvable:$true] %s46
      %52 = dma.hbm_to_vmem [thread:$0]  %s45, 1024, %s47, [#allocation6], 128, 128, 8
    $region13: #{tpu_custom_call.1} parent=1 // pred_fallthru
      _
    // Predicated region
    $region14: #{tpu_custom_call.1} parent=1 // pred_check
      _
    $region15: #{tpu_custom_call.1} parent=1 // pred_check_branch
      %54 = sbr.rel (0) target = $region17
    $region16: #{tpu_custom_call.1} parent=1 // pred_region
      %56 = dma.done [#allocation3], 1024
    $region17: #{tpu_custom_call.1} parent=1 // pred_fallthru
      _
    // Predicated region
    $region18: #{tpu_custom_call.1} parent=1 // pred_check
      _
    $region19: #{tpu_custom_call.1} parent=1 // pred_check_branch
      %58 = sbr.rel (0) target = $region21
    $region20: #{tpu_custom_call.1} parent=1 // pred_region
      %60 = dma.done [#allocation6], 1024
    $region21: #{tpu_custom_call.1} parent=1 // pred_fallthru
      _
    // Predicated region
    $region22: #{tpu_custom_call.1} parent=1 // pred_check
      _
    $region23: #{tpu_custom_call.1} parent=1 // pred_check_branch
      %62 = sbr.rel (0) target = $region25
    $region24: #{tpu_custom_call.1} parent=1 // pred_region
      %64 = dma.done [#allocation6], 1024
    $region25: #{tpu_custom_call.1} parent=1 // pred_fallthru
      _
    %v65 = vld [vmem:[#allocation2] sm:$0xff]
    %v66 = vld [vmem:[#allocation2 + $0x8] sm:$0xff]
    %v67 = vld [vmem:[#allocation2 + $0x10] sm:$0xff]
    %v68 = vld [vmem:[#allocation2 + $0x18] sm:$0xff]
    %v69 = vld [vmem:[#allocation2 + $0x20] sm:$0xff]
    %v70 = vld [vmem:[#allocation2 + $0x28] sm:$0xff]
    %v71 = vld [vmem:[#allocation2 + $0x30] sm:$0xff]
    %v72 = vld [vmem:[#allocation2 + $0x38] sm:$0xff]
    %v73 = vld [vmem:[#allocation5] sm:$0xff]
    %v74 = vld [vmem:[#allocation5 + $0x8] sm:$0xff]
    %v75 = vld [vmem:[#allocation5 + $0x10] sm:$0xff]
    %v76 = vld [vmem:[#allocation5 + $0x18] sm:$0xff]
    %v77 = vld [vmem:[#allocation5 + $0x20] sm:$0xff]
    %v78 = vld [vmem:[#allocation5 + $0x28] sm:$0xff]
    %v79 = vld [vmem:[#allocation5 + $0x30] sm:$0xff]
    %v80 = vld [vmem:[#allocation5 + $0x38] sm:$0xff]
    %v81 = vld [vmem:[#allocation7] sm:$0xff]
    %v82 = vld [vmem:[#allocation7 + $0x8] sm:$0xff]
    %v83 = vld [vmem:[#allocation7 + $0x10] sm:$0xff]
    %v84 = vld [vmem:[#allocation7 + $0x18] sm:$0xff]
    %v85 = vld [vmem:[#allocation7 + $0x20] sm:$0xff]
    %v86 = vld [vmem:[#allocation7 + $0x28] sm:$0xff]
    %v87 = vld [vmem:[#allocation7 + $0x30] sm:$0xff]
    %v88 = vld [vmem:[#allocation7 + $0x38] sm:$0xff]
    %v89 = vmul.f32 %v65, 0.35355338
    %v90 = vmul.f32 %v66, 0.35355338
    %v91 = vmul.f32 %v67, 0.35355338
    %v92 = vmul.f32 %v68, 0.35355338
    %v93 = vmul.f32 %v69, 0.35355338
    %v94 = vmul.f32 %v70, 0.35355338
    %v95 = vmul.f32 %v71, 0.35355338
    %v96 = vmul.f32 %v72, 0.35355338
    %98 = vset.pattern.permute.xlu0 0
    %99 = vperm.xlu0 %98, %v89
    %v100 = vpop.permute.xlu0 %99
    %103 = vset.pattern.permute.xlu0 0
    %104 = vperm.xlu0 %103, %v90
    %v105 = vpop.permute.xlu0 %104
    %108 = vset.pattern.permute.xlu0 0
    %109 = vperm.xlu0 %108, %v91
    %v110 = vpop.permute.xlu0 %109
    %113 = vset.pattern.permute.xlu0 0
    %114 = vperm.xlu0 %113, %v92
    %v115 = vpop.permute.xlu0 %114
    %118 = vset.pattern.permute.xlu0 0
    %119 = vperm.xlu0 %118, %v93
    %v120 = vpop.permute.xlu0 %119
    %123 = vset.pattern.permute.xlu0 0
    %124 = vperm.xlu0 %123, %v94
    %v125 = vpop.permute.xlu0 %124
    %128 = vset.pattern.permute.xlu0 0
    %129 = vperm.xlu0 %128, %v95
    %v130 = vpop.permute.xlu0 %129
    %133 = vset.pattern.permute.xlu0 0
    %134 = vperm.xlu0 %133, %v96
    %v135 = vpop.permute.xlu0 %134
    %v137 = vperm.slane %v73, 0
    %v138 = vperm.slane %v74, 0
    %v139 = vperm.slane %v75, 0
    %v140 = vperm.slane %v76, 0
    %v141 = vperm.slane %v77, 0
    %v142 = vperm.slane %v78, 0
    %v143 = vperm.slane %v79, 0
    %v144 = vperm.slane %v80, 0
    %v145 = vmul.f32 %v100, %v137
    %v146 = vmul.f32 %v105, %v138
    %v147 = vmul.f32 %v110, %v139
    %v148 = vmul.f32 %v115, %v140
    %v149 = vmul.f32 %v120, %v141
    %v150 = vmul.f32 %v125, %v142
    %v151 = vmul.f32 %v130, %v143
    %v152 = vmul.f32 %v135, %v144
    %153 = vset.pattern.permute.xlu0 1
    %154 = vperm.xlu0 %153, %v89
    %v155 = vpop.permute.xlu0 %154
    %157 = vset.pattern.permute.xlu0 1
    %158 = vperm.xlu0 %157, %v90
    %v159 = vpop.permute.xlu0 %158
    %161 = vset.pattern.permute.xlu0 1
    %162 = vperm.xlu0 %161, %v91
    %v163 = vpop.permute.xlu0 %162
    %165 = vset.pattern.permute.xlu0 1
    %166 = vperm.xlu0 %165, %v92
    %v167 = vpop.permute.xlu0 %166
    %169 = vset.pattern.permute.xlu0 1
    %170 = vperm.xlu0 %169, %v93
    %v171 = vpop.permute.xlu0 %170
    %173 = vset.pattern.permute.xlu0 1
    %174 = vperm.xlu0 %173, %v94
    %v175 = vpop.permute.xlu0 %174
    %177 = vset.pattern.permute.xlu0 1
    %178 = vperm.xlu0 %177, %v95
    %v179 = vpop.permute.xlu0 %178
    %181 = vset.pattern.permute.xlu0 1
    %182 = vperm.xlu0 %181, %v96
    %v183 = vpop.permute.xlu0 %182
    %v185 = vperm.slane %v73, 1
    %v186 = vperm.slane %v74, 1
    %v187 = vperm.slane %v75, 1
    %v188 = vperm.slane %v76, 1
    %v189 = vperm.slane %v77, 1
    %v190 = vperm.slane %v78, 1
    %v191 = vperm.slane %v79, 1
    %v192 = vperm.slane %v80, 1
    %v193 = vmul.f32 %v155, %v185
    %v194 = vmul.f32 %v159, %v186
    %v195 = vmul.f32 %v163, %v187
    %v196 = vmul.f32 %v167, %v188
    %v197 = vmul.f32 %v171, %v189
    %v198 = vmul.f32 %v175, %v190
    %v199 = vmul.f32 %v179, %v191
    %v200 = vmul.f32 %v183, %v192
    %v201 = vadd.f32 %v145, %v193
    %v202 = vadd.f32 %v146, %v194
    %v203 = vadd.f32 %v147, %v195
    %v204 = vadd.f32 %v148, %v196
    %v205 = vadd.f32 %v149, %v197
    %v206 = vadd.f32 %v150, %v198
    %v207 = vadd.f32 %v151, %v199
    %v208 = vadd.f32 %v152, %v200
    %209 = vset.pattern.permute.xlu0 2
    %210 = vperm.xlu0 %209, %v89
    %v211 = vpop.permute.xlu0 %210
    %213 = vset.pattern.permute.xlu0 2
    %214 = vperm.xlu0 %213, %v90
    %v215 = vpop.permute.xlu0 %214
    %217 = vset.pattern.permute.xlu0 2
    %218 = vperm.xlu0 %217, %v91
    %v219 = vpop.permute.xlu0 %218
    %221 = vset.pattern.permute.xlu0 2
    %222 = vperm.xlu0 %221, %v92
    %v223 = vpop.permute.xlu0 %222
    %225 = vset.pattern.permute.xlu0 2
    %226 = vperm.xlu0 %225, %v93
    %v227 = vpop.permute.xlu0 %226
    %229 = vset.pattern.permute.xlu0 2
    %230 = vperm.xlu0 %229, %v94
    %v231 = vpop.permute.xlu0 %230
    %233 = vset.pattern.permute.xlu0 2
    %234 = vperm.xlu0 %233, %v95
    %v235 = vpop.permute.xlu0 %234
    %237 = vset.pattern.permute.xlu0 2
    %238 = vperm.xlu0 %237, %v96
    %v239 = vpop.permute.xlu0 %238
    %v241 = vperm.slane %v73, 2
    %v242 = vperm.slane %v74, 2
    %v243 = vperm.slane %v75, 2
    %v244 = vperm.slane %v76, 2
    %v245 = vperm.slane %v77, 2
    %v246 = vperm.slane %v78, 2
    %v247 = vperm.slane %v79, 2
    %v248 = vperm.slane %v80, 2
    %v249 = vmul.f32 %v211, %v241
    %v250 = vmul.f32 %v215, %v242
    %v251 = vmul.f32 %v219, %v243
    %v252 = vmul.f32 %v223, %v244
    %v253 = vmul.f32 %v227, %v245
    %v254 = vmul.f32 %v231, %v246
    %v255 = vmul.f32 %v235, %v247
    %v256 = vmul.f32 %v239, %v248
    %v257 = vadd.f32 %v201, %v249
    %v258 = vadd.f32 %v202, %v250
    %v259 = vadd.f32 %v203, %v251
    %v260 = vadd.f32 %v204, %v252
    %v261 = vadd.f32 %v205, %v253
    %v262 = vadd.f32 %v206, %v254
    %v263 = vadd.f32 %v207, %v255
    %v264 = vadd.f32 %v208, %v256
    %265 = vset.pattern.permute.xlu0 3
    %266 = vperm.xlu0 %265, %v89
    %v267 = vpop.permute.xlu0 %266
    %269 = vset.pattern.permute.xlu0 3
    %270 = vperm.xlu0 %269, %v90
    %v271 = vpop.permute.xlu0 %270
    %273 = vset.pattern.permute.xlu0 3
    %274 = vperm.xlu0 %273, %v91
    %v275 = vpop.permute.xlu0 %274
    %277 = vset.pattern.permute.xlu0 3
    %278 = vperm.xlu0 %277, %v92
    %v279 = vpop.permute.xlu0 %278
    %281 = vset.pattern.permute.xlu0 3
    %282 = vperm.xlu0 %281, %v93
    %v283 = vpop.permute.xlu0 %282
    %285 = vset.pattern.permute.xlu0 3
    %286 = vperm.xlu0 %285, %v94
    %v287 = vpop.permute.xlu0 %286
    %289 = vset.pattern.permute.xlu0 3
    %290 = vperm.xlu0 %289, %v95
    %v291 = vpop.permute.xlu0 %290
    %293 = vset.pattern.permute.xlu0 3
    %294 = vperm.xlu0 %293, %v96
    %v295 = vpop.permute.xlu0 %294
    %v297 = vperm.slane %v73, 3
    %v298 = vperm.slane %v74, 3
    %v299 = vperm.slane %v75, 3
    %v300 = vperm.slane %v76, 3
    %v301 = vperm.slane %v77, 3
    %v302 = vperm.slane %v78, 3
    %v303 = vperm.slane %v79, 3
    %v304 = vperm.slane %v80, 3
    %v305 = vmul.f32 %v267, %v297
    %v306 = vmul.f32 %v271, %v298
    %v307 = vmul.f32 %v275, %v299
    %v308 = vmul.f32 %v279, %v300
    %v309 = vmul.f32 %v283, %v301
    %v310 = vmul.f32 %v287, %v302
    %v311 = vmul.f32 %v291, %v303
    %v312 = vmul.f32 %v295, %v304
    %v313 = vadd.f32 %v257, %v305
    %v314 = vadd.f32 %v258, %v306
    %v315 = vadd.f32 %v259, %v307
    %v316 = vadd.f32 %v260, %v308
    %v317 = vadd.f32 %v261, %v309
    %v318 = vadd.f32 %v262, %v310
    %v319 = vadd.f32 %v263, %v311
    %v320 = vadd.f32 %v264, %v312
    %321 = vset.pattern.permute.xlu0 4
    %322 = vperm.xlu0 %321, %v89
    %v323 = vpop.permute.xlu0 %322
    %325 = vset.pattern.permute.xlu0 4
    %326 = vperm.xlu0 %325, %v90
    %v327 = vpop.permute.xlu0 %326
    %329 = vset.pattern.permute.xlu0 4
    %330 = vperm.xlu0 %329, %v91
    %v331 = vpop.permute.xlu0 %330
    %333 = vset.pattern.permute.xlu0 4
    %334 = vperm.xlu0 %333, %v92
    %v335 = vpop.permute.xlu0 %334
    %337 = vset.pattern.permute.xlu0 4
    %338 = vperm.xlu0 %337, %v93
    %v339 = vpop.permute.xlu0 %338
    %341 = vset.pattern.permute.xlu0 4
    %342 = vperm.xlu0 %341, %v94
    %v343 = vpop.permute.xlu0 %342
    %345 = vset.pattern.permute.xlu0 4
    %346 = vperm.xlu0 %345, %v95
    %v347 = vpop.permute.xlu0 %346
    %349 = vset.pattern.permute.xlu0 4
    %350 = vperm.xlu0 %349, %v96
    %v351 = vpop.permute.xlu0 %350
    %v353 = vperm.slane %v73, 4
    %v354 = vperm.slane %v74, 4
    %v355 = vperm.slane %v75, 4
    %v356 = vperm.slane %v76, 4
    %v357 = vperm.slane %v77, 4
    %v358 = vperm.slane %v78, 4
    %v359 = vperm.slane %v79, 4
    %v360 = vperm.slane %v80, 4
    %v361 = vmul.f32 %v323, %v353
    %v362 = vmul.f32 %v327, %v354
    %v363 = vmul.f32 %v331, %v355
    %v364 = vmul.f32 %v335, %v356
    %v365 = vmul.f32 %v339, %v357
    %v366 = vmul.f32 %v343, %v358
    %v367 = vmul.f32 %v347, %v359
    %v368 = vmul.f32 %v351, %v360
    %v369 = vadd.f32 %v313, %v361
    %v370 = vadd.f32 %v314, %v362
    %v371 = vadd.f32 %v315, %v363
    %v372 = vadd.f32 %v316, %v364
    %v373 = vadd.f32 %v317, %v365
    %v374 = vadd.f32 %v318, %v366
    %v375 = vadd.f32 %v319, %v367
    %v376 = vadd.f32 %v320, %v368
    %377 = vset.pattern.permute.xlu0 5
    %378 = vperm.xlu0 %377, %v89
    %v379 = vpop.permute.xlu0 %378
    %381 = vset.pattern.permute.xlu0 5
    %382 = vperm.xlu0 %381, %v90
    %v383 = vpop.permute.xlu0 %382
    %385 = vset.pattern.permute.xlu0 5
    %386 = vperm.xlu0 %385, %v91
    %v387 = vpop.permute.xlu0 %386
    %389 = vset.pattern.permute.xlu0 5
    %390 = vperm.xlu0 %389, %v92
    %v391 = vpop.permute.xlu0 %390
    %393 = vset.pattern.permute.xlu0 5
    %394 = vperm.xlu0 %393, %v93
    %v395 = vpop.permute.xlu0 %394
    %397 = vset.pattern.permute.xlu0 5
    %398 = vperm.xlu0 %397, %v94
    %v399 = vpop.permute.xlu0 %398
    %401 = vset.pattern.permute.xlu0 5
    %402 = vperm.xlu0 %401, %v95
    %v403 = vpop.permute.xlu0 %402
    %405 = vset.pattern.permute.xlu0 5
    %406 = vperm.xlu0 %405, %v96
    %v407 = vpop.permute.xlu0 %406
    %v409 = vperm.slane %v73, 5
    %v410 = vperm.slane %v74, 5
    %v411 = vperm.slane %v75, 5
    %v412 = vperm.slane %v76, 5
    %v413 = vperm.slane %v77, 5
    %v414 = vperm.slane %v78, 5
    %v415 = vperm.slane %v79, 5
    %v416 = vperm.slane %v80, 5
    %v417 = vmul.f32 %v379, %v409
    %v418 = vmul.f32 %v383, %v410
    %v419 = vmul.f32 %v387, %v411
    %v420 = vmul.f32 %v391, %v412
    %v421 = vmul.f32 %v395, %v413
    %v422 = vmul.f32 %v399, %v414
    %v423 = vmul.f32 %v403, %v415
    %v424 = vmul.f32 %v407, %v416
    %v425 = vadd.f32 %v369, %v417
    %v426 = vadd.f32 %v370, %v418
    %v427 = vadd.f32 %v371, %v419
    %v428 = vadd.f32 %v372, %v420
    %v429 = vadd.f32 %v373, %v421
    %v430 = vadd.f32 %v374, %v422
    %v431 = vadd.f32 %v375, %v423
    %v432 = vadd.f32 %v376, %v424
    %433 = vset.pattern.permute.xlu0 6
    %434 = vperm.xlu0 %433, %v89
    %v435 = vpop.permute.xlu0 %434
    %437 = vset.pattern.permute.xlu0 6
    %438 = vperm.xlu0 %437, %v90
    %v439 = vpop.permute.xlu0 %438
    %441 = vset.pattern.permute.xlu0 6
    %442 = vperm.xlu0 %441, %v91
    %v443 = vpop.permute.xlu0 %442
    %445 = vset.pattern.permute.xlu0 6
    %446 = vperm.xlu0 %445, %v92
    %v447 = vpop.permute.xlu0 %446
    %449 = vset.pattern.permute.xlu0 6
    %450 = vperm.xlu0 %449, %v93
    %v451 = vpop.permute.xlu0 %450
    %453 = vset.pattern.permute.xlu0 6
    %454 = vperm.xlu0 %453, %v94
    %v455 = vpop.permute.xlu0 %454
    %457 = vset.pattern.permute.xlu0 6
    %458 = vperm.xlu0 %457, %v95
    %v459 = vpop.permute.xlu0 %458
    %461 = vset.pattern.permute.xlu0 6
    %462 = vperm.xlu0 %461, %v96
    %v463 = vpop.permute.xlu0 %462
    %v465 = vperm.slane %v73, 6
    %v466 = vperm.slane %v74, 6
    %v467 = vperm.slane %v75, 6
    %v468 = vperm.slane %v76, 6
    %v469 = vperm.slane %v77, 6
    %v470 = vperm.slane %v78, 6
    %v471 = vperm.slane %v79, 6
    %v472 = vperm.slane %v80, 6
    %v473 = vmul.f32 %v435, %v465
    %v474 = vmul.f32 %v439, %v466
    %v475 = vmul.f32 %v443, %v467
    %v476 = vmul.f32 %v447, %v468
    %v477 = vmul.f32 %v451, %v469
    %v478 = vmul.f32 %v455, %v470
    %v479 = vmul.f32 %v459, %v471
    %v480 = vmul.f32 %v463, %v472
    %v481 = vadd.f32 %v425, %v473
    %v482 = vadd.f32 %v426, %v474
    %v483 = vadd.f32 %v427, %v475
    %v484 = vadd.f32 %v428, %v476
    %v485 = vadd.f32 %v429, %v477
    %v486 = vadd.f32 %v430, %v478
    %v487 = vadd.f32 %v431, %v479
    %v488 = vadd.f32 %v432, %v480
    %489 = vset.pattern.permute.xlu0 7
    %490 = vperm.xlu0 %489, %v89
    %v491 = vpop.permute.xlu0 %490
    %493 = vset.pattern.permute.xlu0 7
    %494 = vperm.xlu0 %493, %v90
    %v495 = vpop.permute.xlu0 %494
    %497 = vset.pattern.permute.xlu0 7
    %498 = vperm.xlu0 %497, %v91
    %v499 = vpop.permute.xlu0 %498
    %501 = vset.pattern.permute.xlu0 7
    %502 = vperm.xlu0 %501, %v92
    %v503 = vpop.permute.xlu0 %502
    %505 = vset.pattern.permute.xlu0 7
    %506 = vperm.xlu0 %505, %v93
    %v507 = vpop.permute.xlu0 %506
    %509 = vset.pattern.permute.xlu0 7
    %510 = vperm.xlu0 %509, %v94
    %v511 = vpop.permute.xlu0 %510
    %513 = vset.pattern.permute.xlu0 7
    %514 = vperm.xlu0 %513, %v95
    %v515 = vpop.permute.xlu0 %514
    %517 = vset.pattern.permute.xlu0 7
    %518 = vperm.xlu0 %517, %v96
    %v519 = vpop.permute.xlu0 %518
    %v521 = vperm.slane %v73, 7
    %v522 = vperm.slane %v74, 7
    %v523 = vperm.slane %v75, 7
    %v524 = vperm.slane %v76, 7
    %v525 = vperm.slane %v77, 7
    %v526 = vperm.slane %v78, 7
    %v527 = vperm.slane %v79, 7
    %v528 = vperm.slane %v80, 7
    %v529 = vmul.f32 %v491, %v521
    %v530 = vmul.f32 %v495, %v522
    %v531 = vmul.f32 %v499, %v523
    %v532 = vmul.f32 %v503, %v524
    %v533 = vmul.f32 %v507, %v525
    %v534 = vmul.f32 %v511, %v526
    %v535 = vmul.f32 %v515, %v527
    %v536 = vmul.f32 %v519, %v528
    %v537 = vadd.f32 %v481, %v529
    %v538 = vadd.f32 %v482, %v530
    %v539 = vadd.f32 %v483, %v531
    %v540 = vadd.f32 %v484, %v532
    %v541 = vadd.f32 %v485, %v533
    %v542 = vadd.f32 %v486, %v534
    %v543 = vadd.f32 %v487, %v535
    %v544 = vadd.f32 %v488, %v536
    %vm545 = vcmask 64512
    %v546 = vsel %vm545, %v537, -inf
    %547 = vmax.xlane.f32.xlu0 %v546
    %v548 = vpop.xlane.xlu0 %547
    %v549 = vsel %vm545, %v538, -inf
    %550 = vmax.xlane.f32.xlu0 %v549
    %v551 = vpop.xlane.xlu0 %550
    %v552 = vsel %vm545, %v539, -inf
    %553 = vmax.xlane.f32.xlu0 %v552
    %v554 = vpop.xlane.xlu0 %553
    %v555 = vsel %vm545, %v540, -inf
    %556 = vmax.xlane.f32.xlu0 %v555
    %v557 = vpop.xlane.xlu0 %556
    %v558 = vsel %vm545, %v541, -inf
    %559 = vmax.xlane.f32.xlu0 %v558
    %v560 = vpop.xlane.xlu0 %559
    %v561 = vsel %vm545, %v542, -inf
    %562 = vmax.xlane.f32.xlu0 %v561
    %v563 = vpop.xlane.xlu0 %562
    %v564 = vsel %vm545, %v543, -inf
    %565 = vmax.xlane.f32.xlu0 %v564
    %v566 = vpop.xlane.xlu0 %565
    %v567 = vsel %vm545, %v544, -inf
    %568 = vmax.xlane.f32.xlu0 %v567
    %v569 = vpop.xlane.xlu0 %568
    %v570 = vsub.f32 %v537, %v548
    %v571 = vsub.f32 %v538, %v551
    %v572 = vsub.f32 %v539, %v554
    %v573 = vsub.f32 %v540, %v557
    %v574 = vsub.f32 %v541, %v560
    %v575 = vsub.f32 %v542, %v563
    %v576 = vsub.f32 %v543, %v566
    %v577 = vsub.f32 %v544, %v569
    %v578 = vmul.f32 %v570, 1.442695
    %v579 = vpow.pop %v578
    %v580 = vmul.f32 %v571, 1.442695
    %v581 = vpow.pop %v580
    %v582 = vmul.f32 %v572, 1.442695
    %v583 = vpow.pop %v582
    %v584 = vmul.f32 %v573, 1.442695
    %v585 = vpow.pop %v584
    %v586 = vmul.f32 %v574, 1.442695
    %v587 = vpow.pop %v586
    %v588 = vmul.f32 %v575, 1.442695
    %v589 = vpow.pop %v588
    %v590 = vmul.f32 %v576, 1.442695
    %v591 = vpow.pop %v590
    %v592 = vmul.f32 %v577, 1.442695
    %v593 = vpow.pop %v592
    %v594 = vsel %vm545, %v579, 0.0
    %595 = vadd.xlane.f32.xlu0 %v594
    %v596 = vpop.xlane.xlu0 %595
    %v597 = vsel %vm545, %v581, 0.0
    %598 = vadd.xlane.f32.xlu0 %v597
    %v599 = vpop.xlane.xlu0 %598
    %v600 = vsel %vm545, %v583, 0.0
    %601 = vadd.xlane.f32.xlu0 %v600
    %v602 = vpop.xlane.xlu0 %601
    %v603 = vsel %vm545, %v585, 0.0
    %604 = vadd.xlane.f32.xlu0 %v603
    %v605 = vpop.xlane.xlu0 %604
    %v606 = vsel %vm545, %v587, 0.0
    %607 = vadd.xlane.f32.xlu0 %v606
    %v608 = vpop.xlane.xlu0 %607
    %v609 = vsel %vm545, %v589, 0.0
    %610 = vadd.xlane.f32.xlu0 %v609
    %v611 = vpop.xlane.xlu0 %610
    %v612 = vsel %vm545, %v591, 0.0
    %613 = vadd.xlane.f32.xlu0 %v612
    %v614 = vpop.xlane.xlu0 %613
    %v615 = vsel %vm545, %v593, 0.0
    %616 = vadd.xlane.f32.xlu0 %v615
    %v617 = vpop.xlane.xlu0 %616
    %v618 = vrcp.pop %v596
    %v619 = vmul.f32 %v596, %v618
    %v620 = vsub.f32 1.0, %v619
    %v621 = vmul.f32 %v618, %v620
    %v622 = vadd.f32 %v618, %v621
    %vm623 = vweird.f32 %v596
    %vm624 = vweird.f32 %v618
    %vm625 = vmor %vm623, %vm624
    %v626 = vsel %vm625, %v618, %v622
    %v627 = vand.u32 2147483647, %v596
    %vm628 = vcmp.eq.f32.partialorder %v627, 8.507059e+37
    %v629 = vand.u32 %v596, 2147483648
    %v630 = vor.u32 1.1754944e-38, %v629
    %v631 = vsel %vm628, %v630, %v626
    %v632 = vrcp.pop %v599
    %v633 = vmul.f32 %v599, %v632
    %v634 = vsub.f32 1.0, %v633
    %v635 = vmul.f32 %v632, %v634
    %v636 = vadd.f32 %v632, %v635
    %vm637 = vweird.f32 %v599
    %vm638 = vweird.f32 %v632
    %vm639 = vmor %vm637, %vm638
    %v640 = vsel %vm639, %v632, %v636
    %v641 = vand.u32 2147483647, %v599
    %vm642 = vcmp.eq.f32.partialorder %v641, 8.507059e+37
    %v643 = vand.u32 %v599, 2147483648
    %v644 = vor.u32 1.1754944e-38, %v643
    %v645 = vsel %vm642, %v644, %v640
    %v646 = vrcp.pop %v602
    %v647 = vmul.f32 %v602, %v646
    %v648 = vsub.f32 1.0, %v647
    %v649 = vmul.f32 %v646, %v648
    %v650 = vadd.f32 %v646, %v649
    %vm651 = vweird.f32 %v602
    %vm652 = vweird.f32 %v646
    %vm653 = vmor %vm651, %vm652
    %v654 = vsel %vm653, %v646, %v650
    %v655 = vand.u32 2147483647, %v602
    %vm656 = vcmp.eq.f32.partialorder %v655, 8.507059e+37
    %v657 = vand.u32 %v602, 2147483648
    %v658 = vor.u32 1.1754944e-38, %v657
    %v659 = vsel %vm656, %v658, %v654
    %v660 = vrcp.pop %v605
    %v661 = vmul.f32 %v605, %v660
    %v662 = vsub.f32 1.0, %v661
    %v663 = vmul.f32 %v660, %v662
    %v664 = vadd.f32 %v660, %v663
    %vm665 = vweird.f32 %v605
    %vm666 = vweird.f32 %v660
    %vm667 = vmor %vm665, %vm666
    %v668 = vsel %vm667, %v660, %v664
    %v669 = vand.u32 2147483647, %v605
    %vm670 = vcmp.eq.f32.partialorder %v669, 8.507059e+37
    %v671 = vand.u32 %v605, 2147483648
    %v672 = vor.u32 1.1754944e-38, %v671
    %v673 = vsel %vm670, %v672, %v668
    %v674 = vrcp.pop %v608
    %v675 = vmul.f32 %v608, %v674
    %v676 = vsub.f32 1.0, %v675
    %v677 = vmul.f32 %v674, %v676
    %v678 = vadd.f32 %v674, %v677
    %vm679 = vweird.f32 %v608
    %vm680 = vweird.f32 %v674
    %vm681 = vmor %vm679, %vm680
    %v682 = vsel %vm681, %v674, %v678
    %v683 = vand.u32 2147483647, %v608
    %vm684 = vcmp.eq.f32.partialorder %v683, 8.507059e+37
    %v685 = vand.u32 %v608, 2147483648
    %v686 = vor.u32 1.1754944e-38, %v685
    %v687 = vsel %vm684, %v686, %v682
    %v688 = vrcp.pop %v611
    %v689 = vmul.f32 %v611, %v688
    %v690 = vsub.f32 1.0, %v689
    %v691 = vmul.f32 %v688, %v690
    %v692 = vadd.f32 %v688, %v691
    %vm693 = vweird.f32 %v611
    %vm694 = vweird.f32 %v688
    %vm695 = vmor %vm693, %vm694
    %v696 = vsel %vm695, %v688, %v692
    %v697 = vand.u32 2147483647, %v611
    %vm698 = vcmp.eq.f32.partialorder %v697, 8.507059e+37
    %v699 = vand.u32 %v611, 2147483648
    %v700 = vor.u32 1.1754944e-38, %v699
    %v701 = vsel %vm698, %v700, %v696
    %v702 = vrcp.pop %v614
    %v703 = vmul.f32 %v614, %v702
    %v704 = vsub.f32 1.0, %v703
    %v705 = vmul.f32 %v702, %v704
    %v706 = vadd.f32 %v702, %v705
    %vm707 = vweird.f32 %v614
    %vm708 = vweird.f32 %v702
    %vm709 = vmor %vm707, %vm708
    %v710 = vsel %vm709, %v702, %v706
    %v711 = vand.u32 2147483647, %v614
    %vm712 = vcmp.eq.f32.partialorder %v711, 8.507059e+37
    %v713 = vand.u32 %v614, 2147483648
    %v714 = vor.u32 1.1754944e-38, %v713
    %v715 = vsel %vm712, %v714, %v710
    %v716 = vrcp.pop %v617
    %v717 = vmul.f32 %v617, %v716
    %v718 = vsub.f32 1.0, %v717
    %v719 = vmul.f32 %v716, %v718
    %v720 = vadd.f32 %v716, %v719
    %vm721 = vweird.f32 %v617
    %vm722 = vweird.f32 %v716
    %vm723 = vmor %vm721, %vm722
    %v724 = vsel %vm723, %v716, %v720
    %v725 = vand.u32 2147483647, %v617
    %vm726 = vcmp.eq.f32.partialorder %v725, 8.507059e+37
    %v727 = vand.u32 %v617, 2147483648
    %v728 = vor.u32 1.1754944e-38, %v727
    %v729 = vsel %vm726, %v728, %v724
    %v730 = vmul.f32 %v579, %v631
    %v731 = vmul.f32 %v581, %v645
    %v732 = vmul.f32 %v583, %v659
    %v733 = vmul.f32 %v585, %v673
    %v734 = vmul.f32 %v587, %v687
    %v735 = vmul.f32 %v589, %v701
    %v736 = vmul.f32 %v591, %v715
    %v737 = vmul.f32 %v593, %v729
    %v739 = vsel %vm545, %v730, 0
    %741 = vmatpush.msra.mxu0 0.0
    %742 = vmatpush.msra.mxu0 0.0
    %743 = vmatpush.msra.mxu0 0.0
    %744 = vmatpush.msra.mxu0 0.0
    %745 = vmatpush.msra.mxu0 0.0
    %746 = vmatpush.msra.mxu0 0.0
    %747 = vmatpush.msra.mxu0 0.0
    %748 = vmatpush.msra.mxu0 0.0
    %749 = vmatpush.msra.mxu0 0.0
    %750 = vmatpush.msra.mxu0 0.0
    %751 = vmatpush.msra.mxu0 0.0
    %752 = vmatpush.msra.mxu0 0.0
    %753 = vmatpush.msra.mxu0 0.0
    %754 = vmatpush.msra.mxu0 0.0
    %755 = vmatpush.msra.mxu0 0.0
    %756 = vmatpush.msra.mxu0 %v81
    %757 = vmatmul.f32.gmra.mxu0 %v739
    %v758 = vpop.f32.mrf.mxu0
    %v759 = vadd.f32 0.0, %v758
    %760 = vdwg.mxu0
    %v762 = vsel %vm545, %v731, 0
    %764 = vmatpush.msra.mxu0 0.0
    %765 = vmatpush.msra.mxu0 0.0
    %766 = vmatpush.msra.mxu0 0.0
    %767 = vmatpush.msra.mxu0 0.0
    %768 = vmatpush.msra.mxu0 0.0
    %769 = vmatpush.msra.mxu0 0.0
    %770 = vmatpush.msra.mxu0 0.0
    %771 = vmatpush.msra.mxu0 0.0
    %772 = vmatpush.msra.mxu0 0.0
    %773 = vmatpush.msra.mxu0 0.0
    %774 = vmatpush.msra.mxu0 0.0
    %775 = vmatpush.msra.mxu0 0.0
    %776 = vmatpush.msra.mxu0 0.0
    %777 = vmatpush.msra.mxu0 0.0
    %778 = vmatpush.msra.mxu0 0.0
    %779 = vmatpush.msra.mxu0 %v82
    %780 = vmatmul.f32.gmra.mxu0 %v762
    %v781 = vpop.f32.mrf.mxu0
    %v782 = vadd.f32 0.0, %v781
    %783 = vdwg.mxu0
    %v785 = vsel %vm545, %v732, 0
    %787 = vmatpush.msra.mxu0 0.0
    %788 = vmatpush.msra.mxu0 0.0
    %789 = vmatpush.msra.mxu0 0.0
    %790 = vmatpush.msra.mxu0 0.0
    %791 = vmatpush.msra.mxu0 0.0
    %792 = vmatpush.msra.mxu0 0.0
    %793 = vmatpush.msra.mxu0 0.0
    %794 = vmatpush.msra.mxu0 0.0
    %795 = vmatpush.msra.mxu0 0.0
    %796 = vmatpush.msra.mxu0 0.0
    %797 = vmatpush.msra.mxu0 0.0
    %798 = vmatpush.msra.mxu0 0.0
    %799 = vmatpush.msra.mxu0 0.0
    %800 = vmatpush.msra.mxu0 0.0
    %801 = vmatpush.msra.mxu0 0.0
    %802 = vmatpush.msra.mxu0 %v83
    %803 = vmatmul.f32.gmra.mxu0 %v785
    %v804 = vpop.f32.mrf.mxu0
    %v805 = vadd.f32 0.0, %v804
    %806 = vdwg.mxu0
    %v808 = vsel %vm545, %v733, 0
    %810 = vmatpush.msra.mxu0 0.0
    %811 = vmatpush.msra.mxu0 0.0
    %812 = vmatpush.msra.mxu0 0.0
    %813 = vmatpush.msra.mxu0 0.0
    %814 = vmatpush.msra.mxu0 0.0
    %815 = vmatpush.msra.mxu0 0.0
    %816 = vmatpush.msra.mxu0 0.0
    %817 = vmatpush.msra.mxu0 0.0
    %818 = vmatpush.msra.mxu0 0.0
    %819 = vmatpush.msra.mxu0 0.0
    %820 = vmatpush.msra.mxu0 0.0
    %821 = vmatpush.msra.mxu0 0.0
    %822 = vmatpush.msra.mxu0 0.0
    %823 = vmatpush.msra.mxu0 0.0
    %824 = vmatpush.msra.mxu0 0.0
    %825 = vmatpush.msra.mxu0 %v84
    %826 = vmatmul.f32.gmra.mxu0 %v808
    %v827 = vpop.f32.mrf.mxu0
    %v828 = vadd.f32 0.0, %v827
    %829 = vdwg.mxu0
    %v831 = vsel %vm545, %v734, 0
    %833 = vmatpush.msra.mxu0 0.0
    %834 = vmatpush.msra.mxu0 0.0
    %835 = vmatpush.msra.mxu0 0.0
    %836 = vmatpush.msra.mxu0 0.0
    %837 = vmatpush.msra.mxu0 0.0
    %838 = vmatpush.msra.mxu0 0.0
    %839 = vmatpush.msra.mxu0 0.0
    %840 = vmatpush.msra.mxu0 0.0
    %841 = vmatpush.msra.mxu0 0.0
    %842 = vmatpush.msra.mxu0 0.0
    %843 = vmatpush.msra.mxu0 0.0
    %844 = vmatpush.msra.mxu0 0.0
    %845 = vmatpush.msra.mxu0 0.0
    %846 = vmatpush.msra.mxu0 0.0
    %847 = vmatpush.msra.mxu0 0.0
    %848 = vmatpush.msra.mxu0 %v85
    %849 = vmatmul.f32.gmra.mxu0 %v831
    %v850 = vpop.f32.mrf.mxu0
    %v851 = vadd.f32 0.0, %v850
    %852 = vdwg.mxu0
    %v854 = vsel %vm545, %v735, 0
    %856 = vmatpush.msra.mxu0 0.0
    %857 = vmatpush.msra.mxu0 0.0
    %858 = vmatpush.msra.mxu0 0.0
    %859 = vmatpush.msra.mxu0 0.0
    %860 = vmatpush.msra.mxu0 0.0
    %861 = vmatpush.msra.mxu0 0.0
    %862 = vmatpush.msra.mxu0 0.0
    %863 = vmatpush.msra.mxu0 0.0
    %864 = vmatpush.msra.mxu0 0.0
    %865 = vmatpush.msra.mxu0 0.0
    %866 = vmatpush.msra.mxu0 0.0
    %867 = vmatpush.msra.mxu0 0.0
    %868 = vmatpush.msra.mxu0 0.0
    %869 = vmatpush.msra.mxu0 0.0
    %870 = vmatpush.msra.mxu0 0.0
    %871 = vmatpush.msra.mxu0 %v86
    %872 = vmatmul.f32.gmra.mxu0 %v854
    %v873 = vpop.f32.mrf.mxu0
    %v874 = vadd.f32 0.0, %v873
    %875 = vdwg.mxu0
    %v877 = vsel %vm545, %v736, 0
    %879 = vmatpush.msra.mxu0 0.0
    %880 = vmatpush.msra.mxu0 0.0
    %881 = vmatpush.msra.mxu0 0.0
    %882 = vmatpush.msra.mxu0 0.0
    %883 = vmatpush.msra.mxu0 0.0
    %884 = vmatpush.msra.mxu0 0.0
    %885 = vmatpush.msra.mxu0 0.0
    %886 = vmatpush.msra.mxu0 0.0
    %887 = vmatpush.msra.mxu0 0.0
    %888 = vmatpush.msra.mxu0 0.0
    %889 = vmatpush.msra.mxu0 0.0
    %890 = vmatpush.msra.mxu0 0.0
    %891 = vmatpush.msra.mxu0 0.0
    %892 = vmatpush.msra.mxu0 0.0
    %893 = vmatpush.msra.mxu0 0.0
    %894 = vmatpush.msra.mxu0 %v87
    %895 = vmatmul.f32.gmra.mxu0 %v877
    %v896 = vpop.f32.mrf.mxu0
    %v897 = vadd.f32 0.0, %v896
    %898 = vdwg.mxu0
    %v900 = vsel %vm545, %v737, 0
    %902 = vmatpush.msra.mxu0 0.0
    %903 = vmatpush.msra.mxu0 0.0
    %904 = vmatpush.msra.mxu0 0.0
    %905 = vmatpush.msra.mxu0 0.0
    %906 = vmatpush.msra.mxu0 0.0
    %907 = vmatpush.msra.mxu0 0.0
    %908 = vmatpush.msra.mxu0 0.0
    %909 = vmatpush.msra.mxu0 0.0
    %910 = vmatpush.msra.mxu0 0.0
    %911 = vmatpush.msra.mxu0 0.0
    %912 = vmatpush.msra.mxu0 0.0
    %913 = vmatpush.msra.mxu0 0.0
    %914 = vmatpush.msra.mxu0 0.0
    %915 = vmatpush.msra.mxu0 0.0
    %916 = vmatpush.msra.mxu0 0.0
    %917 = vmatpush.msra.mxu0 %v88
    %918 = vmatmul.f32.gmra.mxu0 %v900
    %v919 = vpop.f32.mrf.mxu0
    %v920 = vadd.f32 0.0, %v919
    %921 = vdwg.mxu0
    %922 = vst.msk [vmem:[#allocation8] sm:$0xff] %vm545, %v759
    %924 = vrot.lane.b32.xlu0 %v782, 8
    %v925 = vpop.permute.xlu0 %924
    %vm927 = vcmask 130112
    %928 = vst.msk [vmem:[#allocation8] sm:$0xff] %vm927, %v925
    %930 = vrot.lane.b32.xlu0 %v805, 16
    %v931 = vpop.permute.xlu0 %930
    %vm933 = vcmask 195712
    %934 = vst.msk [vmem:[#allocation8] sm:$0xff] %vm933, %v931
    %936 = vrot.lane.b32.xlu0 %v828, 24
    %v937 = vpop.permute.xlu0 %936
    %vm939 = vcmask 261312
    %940 = vst.msk [vmem:[#allocation8] sm:$0xff] %vm939, %v937
    %942 = vrot.lane.b32.xlu0 %v851, 32
    %v943 = vpop.permute.xlu0 %942
    %vm945 = vcmask 326912
    %946 = vst.msk [vmem:[#allocation8] sm:$0xff] %vm945, %v943
    %948 = vrot.lane.b32.xlu0 %v874, 40
    %v949 = vpop.permute.xlu0 %948
    %vm951 = vcmask 392512
    %952 = vst.msk [vmem:[#allocation8] sm:$0xff] %vm951, %v949
    %954 = vrot.lane.b32.xlu0 %v897, 48
    %v955 = vpop.permute.xlu0 %954
    %vm957 = vcmask 458112
    %958 = vst.msk [vmem:[#allocation8] sm:$0xff] %vm957, %v955
    %960 = vrot.lane.b32.xlu0 %v920, 56
    %v961 = vpop.permute.xlu0 %960
    %vm963 = vcmask 523712
    %964 = vst.msk [vmem:[#allocation8] sm:$0xff] %vm963, %v961
    %965 = vst.msk [vmem:[#allocation9] sm:$0xff] %vm545, %v730
    %966 = vrot.lane.b32.xlu0 %v731, 8
    %v967 = vpop.permute.xlu0 %966
    %969 = vst.msk [vmem:[#allocation9] sm:$0xff] %vm927, %v967
    %970 = vrot.lane.b32.xlu0 %v732, 16
    %v971 = vpop.permute.xlu0 %970
    %973 = vst.msk [vmem:[#allocation9] sm:$0xff] %vm933, %v971
    %974 = vrot.lane.b32.xlu0 %v733, 24
    %v975 = vpop.permute.xlu0 %974
    %977 = vst.msk [vmem:[#allocation9] sm:$0xff] %vm939, %v975
    %978 = vrot.lane.b32.xlu0 %v734, 32
    %v979 = vpop.permute.xlu0 %978
    %981 = vst.msk [vmem:[#allocation9] sm:$0xff] %vm945, %v979
    %982 = vrot.lane.b32.xlu0 %v735, 40
    %v983 = vpop.permute.xlu0 %982
    %985 = vst.msk [vmem:[#allocation9] sm:$0xff] %vm951, %v983
    %986 = vrot.lane.b32.xlu0 %v736, 48
    %v987 = vpop.permute.xlu0 %986
    %989 = vst.msk [vmem:[#allocation9] sm:$0xff] %vm957, %v987
    %990 = vrot.lane.b32.xlu0 %v737, 56
    %v991 = vpop.permute.xlu0 %990
    %993 = vst.msk [vmem:[#allocation9] sm:$0xff] %vm963, %v991
    // Predicated region
    $region26: #{tpu_custom_call.1} parent=1 // pred_check
      _
    $region27: #{tpu_custom_call.1} parent=1 // pred_check_branch
      %995 = sbr.rel (0) target = $region29
    $region28: #{tpu_custom_call.1} parent=1 // pred_region
      %997 = vsyncadd [#allocation4], 0
      %s999 = sshll.u32 [#allocation8], 4
      %s1000 = int_to_ptr.vmem [resolvable:$true] %s999
      %s1001 = sshll.u32 %s3, 4
      %s1002 = int_to_ptr.hbm [resolvable:$true] %s1001
      %1004 = dma.vmem_to_hbm [thread:$0]  %s1000, 128, %s1002, [#allocation4]
    $region29: #{tpu_custom_call.1} parent=1 // pred_fallthru
      _
    // Predicated region
    $region30: #{tpu_custom_call.1} parent=1 // pred_check
      _
    $region31: #{tpu_custom_call.1} parent=1 // pred_check_branch
      %1006 = sbr.rel (0) target = $region33
    $region32: #{tpu_custom_call.1} parent=1 // pred_region
      %1008 = vsyncadd [#allocation10], 0
      %s1010 = sshll.u32 [#allocation9], 4
      %s1011 = int_to_ptr.vmem [resolvable:$true] %s1010
      %s1012 = sshll.u32 %s4, 4
      %s1013 = int_to_ptr.hbm [resolvable:$true] %s1012
      %1015 = dma.vmem_to_hbm [thread:$0]  %s1011, 128, %s1013, [#allocation10]
    $region33: #{tpu_custom_call.1} parent=1 // pred_fallthru
      _
    // Predicated region
    $region34: #{tpu_custom_call.1} parent=1 // pred_check
      _
    $region35: #{tpu_custom_call.1} parent=1 // pred_check_branch
      %1017 = sbr.rel (0) target = $region37
    $region36: #{tpu_custom_call.1} parent=1 // pred_region
      %1019 = dma.done [#allocation4], 128
    $region37: #{tpu_custom_call.1} parent=1 // pred_fallthru
      _
    // Predicated region
    $region38: #{tpu_custom_call.1} parent=1 // pred_check
      _
    $region39: #{tpu_custom_call.1} parent=1 // pred_check_branch
      %1021 = sbr.rel (0) target = $region41
    $region40: #{tpu_custom_call.1} parent=1 // pred_region
      %1023 = dma.done [#allocation10], 128
    $region41: #{tpu_custom_call.1} parent=1 // pred_fallthru
      _
    %1024 = vsyncpa [#allocation3], 1
    %1025 = vsyncpa [#allocation6], 1
    %1026 = vsyncpa [#allocation4], 1
    %1027 = vsyncpa [#allocation10], 1

</llo_original>
